<compile_context>
chip_gen: v6e
topology: v6e:2x2x1
jax: 0.10.0
libtpu: 0.0.40
codegen_flags: <defaults>
</compile_context>

<pallas_src>
import jax
import jax.numpy as jnp
from jax.experimental import pallas as pl
from jax.experimental.pallas import tpu as pltpu


def _round_up(n, m):
    return ((n + m - 1) // m) * m


def _sigmoid(h):
    # One EUP push (tanh) + two cheap VPU ops instead of exp + divide;
    # relieves the single EUP VLIW slot.
    return 0.5 * (jnp.tanh(0.5 * h) + 1.0)


def _mlp_kernel(x_ref, w1_ref, b1_ref, w25_ref, b25_ref,
                w2_ref, b2_ref, w3_ref, b3_ref, o_ref):
    # x_ref: (14, TB); weights: (out, in); biases: (out, 1); o_ref: (1, TB).
    x = x_ref[...]
    h = _sigmoid(jnp.dot(w1_ref[...], x,
                         preferred_element_type=jnp.float32) + b1_ref[...])
    h = _sigmoid(jnp.dot(w25_ref[...], h,
                         preferred_element_type=jnp.float32) + b25_ref[...])
    h = _sigmoid(jnp.dot(w2_ref[...], h,
                         preferred_element_type=jnp.float32) + b2_ref[...])
    o_ref[...] = jnp.dot(w3_ref[...], h,
                         preferred_element_type=jnp.float32) + b3_ref[...]


def finger_forcer_forward(x, params, *, tile_b=512):
    """x: (B, 14) f32. params: PyTorch-layout weights (out,in), biases (out,1).

    Returns (B, 1) f32, matching FingerForcer.forward.
    """
    B = x.shape[0]
    # Lane-dense batch tile: multiple of 128, capped at tile_b so VMEM stays
    # bounded (~2 buffers x tile + ~66 KiB resident weights; fits easily in
    # v7x's 64 MiB scoped VMEM, no need to raise vmem_limit_bytes).
    tb = min(tile_b, _round_up(B, 128))
    b_pad = _round_up(B, tb)

    # Wrapper-side layout plumbing: transpose to (14, B) and pad the lane dim.
    xt = jnp.pad(x.astype(jnp.float32).T, ((0, 0), (0, b_pad - B)))

    w1, b1 = params["w1"], params["b1"]
    w25, b25 = params["w2_5"], params["b2_5"]
    w2, b2 = params["w2"], params["b2"]
    w3, b3 = params["w3"], params["b3"]

    # Weights/biases: full-array blocks, resident across all grid steps.
    resident = lambda a: pl.BlockSpec(a.shape, lambda i: (0, 0))

    out = pl.pallas_call(
        _mlp_kernel,
        out_shape=jax.ShapeDtypeStruct((1, b_pad), jnp.float32),
        grid=(b_pad // tb,),
        in_specs=[pl.BlockSpec((14, tb), lambda i: (0, i)),
                  resident(w1), resident(b1),
                  resident(w25), resident(b25),
                  resident(w2), resident(b2),
                  resident(w3), resident(b3)],
        out_specs=pl.BlockSpec((1, tb), lambda i: (0, i)),
        compiler_params=pltpu.CompilerParams(
            dimension_semantics=("parallel",)),
    )(xt, w1, b1, w25, b25, w2, b2, w3, b3)

    return out[:, :B].T  # (B, 1)


def init_params(key):
    """Deterministic init mirroring nn.Linear: W (out,in), b (out,1)."""
    layers = [("w1", "b1", 14, 100), ("w2_5", "b2_5", 100, 100),
              ("w2", "b2", 100, 50), ("w3", "b3", 50, 1)]
    params = {}
    for wname, bname, fan_in, fan_out in layers:
        key, kw, kb = jax.random.split(key, 3)
        bound = 1.0 / jnp.sqrt(fan_in)
        params[wname] = jax.random.uniform(
            kw, (fan_out, fan_in), jnp.float32, minval=-bound, maxval=bound)
        params[bname] = jax.random.uniform(
            kb, (fan_out, 1), jnp.float32, minval=-bound, maxval=bound)
    return params


def _reference(x, p):
    h = jax.nn.sigmoid(x @ p["w1"].T + p["b1"].T)
    h = jax.nn.sigmoid(h @ p["w2_5"].T + p["b2_5"].T)
    h = jax.nn.sigmoid(h @ p["w2"].T + p["b2"].T)
    return h @ p["w3"].T + p["b3"].T


if __name__ == "__main__":
    key = jax.random.PRNGKey(0)
    key, kx = jax.random.split(key)
    B = 8
    x = jax.random.normal(kx, (B, 14), jnp.float32)

    params = init_params(key)

    out = finger_forcer_forward(x, params)
    out = jax.block_until_ready(out)

    ref = _reference(x, params)
    assert out.shape == (B, 1)
    assert jnp.allclose(out, ref, atol=2e-5, rtol=1e-5), "mismatch vs reference"

    print("KERNEL_OK")
</pallas_src>

<mosaic_0001>
module attributes {stable_mosaic.version = 11 : i64} {
  func.func @_mlp_kernel(%arg0: i32, %arg1: memref<14x128xf32, #tpu.memory_space<vmem>>, %arg2: memref<100x14xf32, #tpu.memory_space<vmem>>, %arg3: memref<100x1xf32, #tpu.memory_space<vmem>>, %arg4: memref<100x100xf32, #tpu.memory_space<vmem>>, %arg5: memref<100x1xf32, #tpu.memory_space<vmem>>, %arg6: memref<50x100xf32, #tpu.memory_space<vmem>>, %arg7: memref<50x1xf32, #tpu.memory_space<vmem>>, %arg8: memref<1x50xf32, #tpu.memory_space<vmem>>, %arg9: memref<1x1xf32, #tpu.memory_space<vmem>>, %arg10: memref<1x128xf32, #tpu.memory_space<vmem>>) attributes {dimension_semantics = [#tpu.dimension_semantics<parallel>], iteration_bounds = array<i64: 1>, scalar_prefetch = 0 : i64, scratch_operands = 0 : i64, tpu.core_type = #tpu.core_type<tc>, window_params = [{transform_indices = @transform_0, window_bounds = array<i64: 14, 128>}, {pipeline_mode = #tpu.pipeline_mode<synchronous>, transform_indices = @transform_1, window_bounds = array<i64: 100, 14>}, {pipeline_mode = #tpu.pipeline_mode<synchronous>, transform_indices = @transform_2, window_bounds = array<i64: 100, 1>}, {pipeline_mode = #tpu.pipeline_mode<synchronous>, transform_indices = @transform_3, window_bounds = array<i64: 100, 100>}, {pipeline_mode = #tpu.pipeline_mode<synchronous>, transform_indices = @transform_4, window_bounds = array<i64: 100, 1>}, {pipeline_mode = #tpu.pipeline_mode<synchronous>, transform_indices = @transform_5, window_bounds = array<i64: 50, 100>}, {pipeline_mode = #tpu.pipeline_mode<synchronous>, transform_indices = @transform_6, window_bounds = array<i64: 50, 1>}, {pipeline_mode = #tpu.pipeline_mode<synchronous>, transform_indices = @transform_7, window_bounds = array<i64: 1, 50>}, {pipeline_mode = #tpu.pipeline_mode<synchronous>, transform_indices = @transform_8, window_bounds = array<i64: 1, 1>}, {transform_indices = @transform_9, window_bounds = array<i64: 1, 128>}]} {
    %c0 = arith.constant 0 : index
    %c0_0 = arith.constant 0 : index
    %0 = vector.load %arg1[%c0, %c0_0] : memref<14x128xf32, #tpu.memory_space<vmem>>, vector<14x128xf32>
    %c0_1 = arith.constant 0 : index
    %c0_2 = arith.constant 0 : index
    %1 = vector.load %arg2[%c0_1, %c0_2] : memref<100x14xf32, #tpu.memory_space<vmem>>, vector<100x14xf32>
    %cst = arith.constant dense<0.000000e+00> : vector<100x128xf32>
    %2 = tpu.matmul %1, %0, %cst {dimension_numbers = #tpu.dot_dimension_numbers<[1], [0], [0], [1], [0, 0, 1, 1], [], []>} : vector<100x14xf32>, vector<14x128xf32>, vector<100x128xf32> -> vector<100x128xf32>
    %c0_3 = arith.constant 0 : index
    %c0_4 = arith.constant 0 : index
    %3 = vector.load %arg3[%c0_3, %c0_4] : memref<100x1xf32, #tpu.memory_space<vmem>>, vector<100x1xf32>
    %4 = vector.broadcast %3 : vector<100x1xf32> to vector<100x128xf32>
    %5 = arith.addf %2, %4 : vector<100x128xf32>
    %cst_5 = arith.constant 5.000000e-01 : f32
    %6 = vector.broadcast %cst_5 : f32 to vector<100x128xf32>
    %7 = arith.mulf %6, %5 : vector<100x128xf32>
    %8 = math.tanh %7 : vector<100x128xf32>
    %cst_6 = arith.constant 1.000000e+00 : f32
    %9 = vector.broadcast %cst_6 : f32 to vector<100x128xf32>
    %10 = arith.addf %8, %9 : vector<100x128xf32>
    %cst_7 = arith.constant 5.000000e-01 : f32
    %11 = vector.broadcast %cst_7 : f32 to vector<100x128xf32>
    %12 = arith.mulf %11, %10 : vector<100x128xf32>
    %c0_8 = arith.constant 0 : index
    %c0_9 = arith.constant 0 : index
    %13 = vector.load %arg4[%c0_8, %c0_9] : memref<100x100xf32, #tpu.memory_space<vmem>>, vector<100x100xf32>
    %cst_10 = arith.constant dense<0.000000e+00> : vector<100x128xf32>
    %14 = tpu.matmul %13, %12, %cst_10 {dimension_numbers = #tpu.dot_dimension_numbers<[1], [0], [0], [1], [0, 0, 1, 1], [], []>} : vector<100x100xf32>, vector<100x128xf32>, vector<100x128xf32> -> vector<100x128xf32>
    %c0_11 = arith.constant 0 : index
    %c0_12 = arith.constant 0 : index
    %15 = vector.load %arg5[%c0_11, %c0_12] : memref<100x1xf32, #tpu.memory_space<vmem>>, vector<100x1xf32>
    %16 = vector.broadcast %15 : vector<100x1xf32> to vector<100x128xf32>
    %17 = arith.addf %14, %16 : vector<100x128xf32>
    %cst_13 = arith.constant 5.000000e-01 : f32
    %18 = vector.broadcast %cst_13 : f32 to vector<100x128xf32>
    %19 = arith.mulf %18, %17 : vector<100x128xf32>
    %20 = math.tanh %19 : vector<100x128xf32>
    %cst_14 = arith.constant 1.000000e+00 : f32
    %21 = vector.broadcast %cst_14 : f32 to vector<100x128xf32>
    %22 = arith.addf %20, %21 : vector<100x128xf32>
    %cst_15 = arith.constant 5.000000e-01 : f32
    %23 = vector.broadcast %cst_15 : f32 to vector<100x128xf32>
    %24 = arith.mulf %23, %22 : vector<100x128xf32>
    %c0_16 = arith.constant 0 : index
    %c0_17 = arith.constant 0 : index
    %25 = vector.load %arg6[%c0_16, %c0_17] : memref<50x100xf32, #tpu.memory_space<vmem>>, vector<50x100xf32>
    %cst_18 = arith.constant dense<0.000000e+00> : vector<50x128xf32>
    %26 = tpu.matmul %25, %24, %cst_18 {dimension_numbers = #tpu.dot_dimension_numbers<[1], [0], [0], [1], [0, 0, 1, 1], [], []>} : vector<50x100xf32>, vector<100x128xf32>, vector<50x128xf32> -> vector<50x128xf32>
    %c0_19 = arith.constant 0 : index
    %c0_20 = arith.constant 0 : index
    %27 = vector.load %arg7[%c0_19, %c0_20] : memref<50x1xf32, #tpu.memory_space<vmem>>, vector<50x1xf32>
    %28 = vector.broadcast %27 : vector<50x1xf32> to vector<50x128xf32>
    %29 = arith.addf %26, %28 : vector<50x128xf32>
    %cst_21 = arith.constant 5.000000e-01 : f32
    %30 = vector.broadcast %cst_21 : f32 to vector<50x128xf32>
    %31 = arith.mulf %30, %29 : vector<50x128xf32>
    %32 = math.tanh %31 : vector<50x128xf32>
    %cst_22 = arith.constant 1.000000e+00 : f32
    %33 = vector.broadcast %cst_22 : f32 to vector<50x128xf32>
    %34 = arith.addf %32, %33 : vector<50x128xf32>
    %cst_23 = arith.constant 5.000000e-01 : f32
    %35 = vector.broadcast %cst_23 : f32 to vector<50x128xf32>
    %36 = arith.mulf %35, %34 : vector<50x128xf32>
    %c0_24 = arith.constant 0 : index
    %c0_25 = arith.constant 0 : index
    %37 = vector.load %arg8[%c0_24, %c0_25] : memref<1x50xf32, #tpu.memory_space<vmem>>, vector<1x50xf32>
    %cst_26 = arith.constant dense<0.000000e+00> : vector<1x128xf32>
    %38 = tpu.matmul %37, %36, %cst_26 {dimension_numbers = #tpu.dot_dimension_numbers<[1], [0], [0], [1], [0, 0, 1, 1], [], []>} : vector<1x50xf32>, vector<50x128xf32>, vector<1x128xf32> -> vector<1x128xf32>
    %c0_27 = arith.constant 0 : index
    %c0_28 = arith.constant 0 : index
    %39 = vector.load %arg9[%c0_27, %c0_28] : memref<1x1xf32, #tpu.memory_space<vmem>>, vector<1x1xf32>
    %40 = vector.broadcast %39 : vector<1x1xf32> to vector<1x128xf32>
    %41 = arith.addf %38, %40 : vector<1x128xf32>
    %c0_29 = arith.constant 0 : index
    %c0_30 = arith.constant 0 : index
    %42 = vector.load %arg10[%c0_29, %c0_30] : memref<1x128xf32, #tpu.memory_space<vmem>>, vector<1x128xf32>
    tpu.vector_store %arg10[%c0_29, %c0_30], %41 {strides = array<i32>} : memref<1x128xf32, #tpu.memory_space<vmem>>, vector<1x128xf32>,
    return
  }
  func.func @transform_0(%arg0: i32) -> (i32, i32) {
    %c0_i32 = arith.constant 0 : i32
    %c0_i32_0 = arith.constant 0 : i32
    return %c0_i32, %arg0 : i32, i32
  }
  func.func @transform_1(%arg0: i32) -> (i32, i32) {
    %c0_i32 = arith.constant 0 : i32
    %c0_i32_0 = arith.constant 0 : i32
    %c0_i32_1 = arith.constant 0 : i32
    return %c0_i32, %c0_i32_0 : i32, i32
  }
  func.func @transform_2(%arg0: i32) -> (i32, i32) {
    %c0_i32 = arith.constant 0 : i32
    %c0_i32_0 = arith.constant 0 : i32
    %c0_i32_1 = arith.constant 0 : i32
    return %c0_i32, %c0_i32_0 : i32, i32
  }
  func.func @transform_3(%arg0: i32) -> (i32, i32) {
    %c0_i32 = arith.constant 0 : i32
    %c0_i32_0 = arith.constant 0 : i32
    %c0_i32_1 = arith.constant 0 : i32
    return %c0_i32, %c0_i32_0 : i32, i32
  }
  func.func @transform_4(%arg0: i32) -> (i32, i32) {
    %c0_i32 = arith.constant 0 : i32
    %c0_i32_0 = arith.constant 0 : i32
    %c0_i32_1 = arith.constant 0 : i32
    return %c0_i32, %c0_i32_0 : i32, i32
  }
  func.func @transform_5(%arg0: i32) -> (i32, i32) {
    %c0_i32 = arith.constant 0 : i32
    %c0_i32_0 = arith.constant 0 : i32
    %c0_i32_1 = arith.constant 0 : i32
    return %c0_i32, %c0_i32_0 : i32, i32
  }
  func.func @transform_6(%arg0: i32) -> (i32, i32) {
    %c0_i32 = arith.constant 0 : i32
    %c0_i32_0 = arith.constant 0 : i32
    %c0_i32_1 = arith.constant 0 : i32
    return %c0_i32, %c0_i32_0 : i32, i32
  }
  func.func @transform_7(%arg0: i32) -> (i32, i32) {
    %c0_i32 = arith.constant 0 : i32
    %c0_i32_0 = arith.constant 0 : i32
    %c0_i32_1 = arith.constant 0 : i32
    return %c0_i32, %c0_i32_0 : i32, i32
  }
  func.func @transform_8(%arg0: i32) -> (i32, i32) {
    %c0_i32 = arith.constant 0 : i32
    %c0_i32_0 = arith.constant 0 : i32
    %c0_i32_1 = arith.constant 0 : i32
    return %c0_i32, %c0_i32_0 : i32, i32
  }
  func.func @transform_9(%arg0: i32) -> (i32, i32) {
    %c0_i32 = arith.constant 0 : i32
    %c0_i32_0 = arith.constant 0 : i32
    return %c0_i32, %arg0 : i32, i32
  }
}

</mosaic_0001>

<llo_original>
// kernel: tpu_custom_call.1
$region0: #{tpu_custom_call.1}
  #allocation0 [shape = 'u32[]', space=smem, size = 0x4, offset = 0x4, fixed_abs, tag = 'smem constant byte address 0x4 - core index']
  #allocation1 [shape = 'u32[144,128]{1,0:T(1,128)}', space=vmem, size = 0x12000, scoped, tag = 'internal scratch']
  #allocation2 [shape = 'f32[1,1]{1,0:T(1,128)S(1)}', space=vmem, size = 0x200, scoped, tag = 'scoped memory for tpu_custom_call.1']
  %s0 = inlined_call_operand.vmem [shape: f32[14,128], index: 0, kind: input, shape index: {}]
  %s1 = inlined_call_operand.vmem [shape: f32[100,14], index: 1, kind: input, shape index: {}]
  %s2 = inlined_call_operand.vmem [shape: f32[100,1], index: 2, kind: input, shape index: {}]
  %s3 = inlined_call_operand.vmem [shape: f32[100,100], index: 3, kind: input, shape index: {}]
  %s4 = inlined_call_operand.vmem [shape: f32[100,1], index: 4, kind: input, shape index: {}]
  %s5 = inlined_call_operand.vmem [shape: f32[50,100], index: 5, kind: input, shape index: {}]
  %s6 = inlined_call_operand.vmem [shape: f32[50,1], index: 6, kind: input, shape index: {}]
  %s7 = inlined_call_operand.vmem [shape: f32[1,50], index: 7, kind: input, shape index: {}]
  %s8 = inlined_call_operand.<no memory space> [shape: f32[1,1], index: 8, kind: input, shape index: {}]
  %s9 = inlined_call_operand.hbm [shape: f32[1,128], index: 9, kind: output, shape index: {}]
  %s10 = sld [smem:[#allocation0]]
  $region46: #{tpu_custom_call.1} parent=0
    _
  %s12 = ssub.s32 1, %s10
  %s13 = scalar_select 0, %s12, %s10
  %v14 = vstv %s8
  %15 = vst [vmem:[#allocation2] sm:$0x1] %v14
  $region1: #{tpu_custom_call.1} parent=0
    #allocation3 [shape = 'u8[512]{0}', space=vmem, size = 0x400, scoped, tag = 'output window, operand 0, single buffered']
    #allocation4 [shape = 's32[1]{0}', space=sflag, size = 0x4, scoped, tag = 'scoped memory for tpu_custom_call.1']
    %16 = vsyncpa [#allocation4], 0
    // Predicated region
    $region2: #{tpu_custom_call.1} parent=1 // pred_check
      _
    $region3: #{tpu_custom_call.1} parent=1 // pred_check_branch
      %18 = sbr.rel (0) target = $region5
    $region4: #{tpu_custom_call.1} parent=1 // pred_region
      _
    $region5: #{tpu_custom_call.1} parent=1 // pred_fallthru
      _
    // Predicated region
    $region6: #{tpu_custom_call.1} parent=1 // pred_check
      _
    $region7: #{tpu_custom_call.1} parent=1 // pred_check_branch
      %20 = sbr.rel (0) target = $region9
    $region8: #{tpu_custom_call.1} parent=1 // pred_region
      _
    $region9: #{tpu_custom_call.1} parent=1 // pred_fallthru
      _
    // Predicated region
    $region10: #{tpu_custom_call.1} parent=1 // pred_check
      _
    $region11: #{tpu_custom_call.1} parent=1 // pred_check_branch
      %22 = sbr.rel (0) target = $region13
    $region12: #{tpu_custom_call.1} parent=1 // pred_region
      _
    $region13: #{tpu_custom_call.1} parent=1 // pred_fallthru
      _
    // Predicated region
    $region14: #{tpu_custom_call.1} parent=1 // pred_check
      _
    $region15: #{tpu_custom_call.1} parent=1 // pred_check_branch
      %24 = sbr.rel (0) target = $region17
    $region16: #{tpu_custom_call.1} parent=1 // pred_region
      _
    $region17: #{tpu_custom_call.1} parent=1 // pred_fallthru
      _
    // Predicated region
    $region18: #{tpu_custom_call.1} parent=1 // pred_check
      _
    $region19: #{tpu_custom_call.1} parent=1 // pred_check_branch
      %26 = sbr.rel (0) target = $region21
    $region20: #{tpu_custom_call.1} parent=1 // pred_region
      _
    $region21: #{tpu_custom_call.1} parent=1 // pred_fallthru
      _
    // Predicated region
    $region22: #{tpu_custom_call.1} parent=1 // pred_check
      _
    $region23: #{tpu_custom_call.1} parent=1 // pred_check_branch
      %28 = sbr.rel (0) target = $region25
    $region24: #{tpu_custom_call.1} parent=1 // pred_region
      _
    $region25: #{tpu_custom_call.1} parent=1 // pred_fallthru
      _
    // Predicated region
    $region26: #{tpu_custom_call.1} parent=1 // pred_check
      _
    $region27: #{tpu_custom_call.1} parent=1 // pred_check_branch
      %30 = sbr.rel (0) target = $region29
    $region28: #{tpu_custom_call.1} parent=1 // pred_region
      _
    $region29: #{tpu_custom_call.1} parent=1 // pred_fallthru
      _
    // Predicated region
    $region30: #{tpu_custom_call.1} parent=1 // pred_check
      _
    $region31: #{tpu_custom_call.1} parent=1 // pred_check_branch
      %32 = sbr.rel (0) target = $region33
    $region32: #{tpu_custom_call.1} parent=1 // pred_region
      _
    $region33: #{tpu_custom_call.1} parent=1 // pred_fallthru
      _
    // Predicated region
    $region34: #{tpu_custom_call.1} parent=1 // pred_check
      _
    $region35: #{tpu_custom_call.1} parent=1 // pred_check_branch
      %34 = sbr.rel (0) target = $region37
    $region36: #{tpu_custom_call.1} parent=1 // pred_region
      _
    $region37: #{tpu_custom_call.1} parent=1 // pred_fallthru
      _
    %v35 = vld [vmem:[%s0] sm:$0xff]
    %v36 = vld [vmem:[%s0 + $0x8] sm:$0x3f]
    %v37 = vld [vmem:[%s1] sm:$0xff]
    %v38 = vld [vmem:[%s1 + $0x8] sm:$0xff]
    %v39 = vld [vmem:[%s1 + $0x10] sm:$0xff]
    %v40 = vld [vmem:[%s1 + $0x18] sm:$0xff]
    %v41 = vld [vmem:[%s1 + $0x20] sm:$0xff]
    %v42 = vld [vmem:[%s1 + $0x28] sm:$0xff]
    %v43 = vld [vmem:[%s1 + $0x30] sm:$0xff]
    %v44 = vld [vmem:[%s1 + $0x38] sm:$0xff]
    %v45 = vld [vmem:[%s1 + $0x40] sm:$0xff]
    %v46 = vld [vmem:[%s1 + $0x48] sm:$0xff]
    %v47 = vld [vmem:[%s1 + $0x50] sm:$0xff]
    %v48 = vld [vmem:[%s1 + $0x58] sm:$0xff]
    %v49 = vld [vmem:[%s1 + $0x60] sm:$0xf]
    %v50 = vld [vmem:[%s2] sm:$0xff]
    %v51 = vld [vmem:[%s2 + $0x8] sm:$0xff]
    %v52 = vld [vmem:[%s2 + $0x10] sm:$0xff]
    %v53 = vld [vmem:[%s2 + $0x18] sm:$0xff]
    %v54 = vld [vmem:[%s2 + $0x20] sm:$0xff]
    %v55 = vld [vmem:[%s2 + $0x28] sm:$0xff]
    %v56 = vld [vmem:[%s2 + $0x30] sm:$0xff]
    %v57 = vld [vmem:[%s2 + $0x38] sm:$0xff]
    %v58 = vld [vmem:[%s2 + $0x40] sm:$0xff]
    %v59 = vld [vmem:[%s2 + $0x48] sm:$0xff]
    %v60 = vld [vmem:[%s2 + $0x50] sm:$0xff]
    %v61 = vld [vmem:[%s2 + $0x58] sm:$0xff]
    %v62 = vld [vmem:[%s2 + $0x60] sm:$0xf]
    %64 = vset.pattern.permute.xlu0 0
    %65 = vperm.xlu0 %64, %v50
    %v66 = vpop.permute.xlu0 %65
    %69 = vset.pattern.permute.xlu0 0
    %70 = vperm.xlu0 %69, %v51
    %v71 = vpop.permute.xlu0 %70
    %74 = vset.pattern.permute.xlu0 0
    %75 = vperm.xlu0 %74, %v52
    %v76 = vpop.permute.xlu0 %75
    %79 = vset.pattern.permute.xlu0 0
    %80 = vperm.xlu0 %79, %v53
    %v81 = vpop.permute.xlu0 %80
    %84 = vset.pattern.permute.xlu0 0
    %85 = vperm.xlu0 %84, %v54
    %v86 = vpop.permute.xlu0 %85
    %89 = vset.pattern.permute.xlu0 0
    %90 = vperm.xlu0 %89, %v55
    %v91 = vpop.permute.xlu0 %90
    %94 = vset.pattern.permute.xlu0 0
    %95 = vperm.xlu0 %94, %v56
    %v96 = vpop.permute.xlu0 %95
    %99 = vset.pattern.permute.xlu0 0
    %100 = vperm.xlu0 %99, %v57
    %v101 = vpop.permute.xlu0 %100
    %104 = vset.pattern.permute.xlu0 0
    %105 = vperm.xlu0 %104, %v58
    %v106 = vpop.permute.xlu0 %105
    %109 = vset.pattern.permute.xlu0 0
    %110 = vperm.xlu0 %109, %v59
    %v111 = vpop.permute.xlu0 %110
    %114 = vset.pattern.permute.xlu0 0
    %115 = vperm.xlu0 %114, %v60
    %v116 = vpop.permute.xlu0 %115
    %119 = vset.pattern.permute.xlu0 0
    %120 = vperm.xlu0 %119, %v61
    %v121 = vpop.permute.xlu0 %120
    %124 = vset.pattern.permute.xlu0 0
    %125 = vperm.xlu0 %124, %v62
    %v126 = vpop.permute.xlu0 %125
    %vm128 = vcmask 113664
    %v130 = vsel %vm128, %v37, 0
    %v133 = vsel %vm128, %v38, 0
    %v136 = vsel %vm128, %v39, 0
    %v139 = vsel %vm128, %v40, 0
    %v142 = vsel %vm128, %v41, 0
    %v145 = vsel %vm128, %v42, 0
    %v148 = vsel %vm128, %v43, 0
    %v151 = vsel %vm128, %v44, 0
    %v154 = vsel %vm128, %v45, 0
    %v157 = vsel %vm128, %v46, 0
    %v160 = vsel %vm128, %v47, 0
    %v163 = vsel %vm128, %v48, 0
    %v166 = vsel %vm128, %v49, 0
    %vm168 = vcmask 1045504
    %v170 = vsel %vm168, %v36, 0
    %172 = vmatprep.subr.mxu0 0.0
    %173 = vmatpush1.msra.mxu0 0.0
    %174 = vmatprep.subr.mxu0 0.0
    %175 = vmatpush1.msra.mxu0 0.0
    %176 = vmatprep.subr.mxu0 0.0
    %177 = vmatpush1.msra.mxu0 0.0
    %178 = vmatprep.subr.mxu0 0.0
    %179 = vmatpush1.msra.mxu0 0.0
    %180 = vmatprep.subr.mxu0 0.0
    %181 = vmatpush1.msra.mxu0 0.0
    %182 = vmatprep.subr.mxu0 0.0
    %183 = vmatpush1.msra.mxu0 0.0
    %184 = vmatprep.subr.mxu0 0.0
    %185 = vmatpush1.msra.mxu0 0.0
    %186 = vmatprep.subr.mxu0 0.0
    %187 = vmatpush1.msra.mxu0 0.0
    %188 = vmatprep.subr.mxu0 0.0
    %189 = vmatpush1.msra.mxu0 0.0
    %190 = vmatprep.subr.mxu0 0.0
    %191 = vmatpush1.msra.mxu0 0.0
    %192 = vmatprep.subr.mxu0 0.0
    %193 = vmatpush1.msra.mxu0 0.0
    %194 = vmatprep.subr.mxu0 0.0
    %195 = vmatpush1.msra.mxu0 0.0
    %196 = vmatprep.subr.mxu0 0.0
    %197 = vmatpush1.msra.mxu0 0.0
    %198 = vmatprep.subr.mxu0 0.0
    %199 = vmatpush1.msra.mxu0 0.0
    %200 = vmatprep.subr.mxu0 0.0
    %201 = vmatpush1.msra.mxu0 %v170
    %202 = vmatprep.subr.mxu0 0.0
    %203 = vmatpush1.msra.mxu0 %v35
    %204 = vmatprep.subr.mxu0 0.0
    %205 = vmatpush2.msra.mxu0 0.0
    %206 = vmatprep.subr.mxu0 0.0
    %207 = vmatpush2.msra.mxu0 0.0
    %208 = vmatprep.subr.mxu0 0.0
    %209 = vmatpush2.msra.mxu0 0.0
    %210 = vmatprep.subr.mxu0 0.0
    %211 = vmatpush2.msra.mxu0 0.0
    %212 = vmatprep.subr.mxu0 0.0
    %213 = vmatpush2.msra.mxu0 0.0
    %214 = vmatprep.subr.mxu0 0.0
    %215 = vmatpush2.msra.mxu0 0.0
    %216 = vmatprep.subr.mxu0 0.0
    %217 = vmatpush2.msra.mxu0 0.0
    %218 = vmatprep.subr.mxu0 0.0
    %219 = vmatpush2.msra.mxu0 0.0
    %220 = vmatprep.subr.mxu0 0.0
    %221 = vmatpush2.msra.mxu0 0.0
    %222 = vmatprep.subr.mxu0 0.0
    %223 = vmatpush2.msra.mxu0 0.0
    %224 = vmatprep.subr.mxu0 0.0
    %225 = vmatpush2.msra.mxu0 0.0
    %226 = vmatprep.subr.mxu0 0.0
    %227 = vmatpush2.msra.mxu0 0.0
    %228 = vmatprep.subr.mxu0 0.0
    %229 = vmatpush2.msra.mxu0 0.0
    %230 = vmatprep.subr.mxu0 0.0
    %231 = vmatpush2.msra.mxu0 0.0
    %232 = vmatprep.subr.mxu0 0.0
    %233 = vmatpush2.msra.mxu0 0.0
    %234 = vmatprep.subr.mxu0 0.0
    %235 = vmatpush2.msra.mxu0 0.0
    %236 = vmatprep.mubr.f32.mxu0 0.0
    %237 = vmatmul.mubr.f32.gmra.mxu0 %v130
    %v238 = vpop.f32.mrf.mxu0
    %v239 = vadd.f32 %v66, %v238
    %v240 = vpop.f32.mrf.mxu0
    %241 = vmatprep.mubr.f32.mxu0 0.0
    %242 = vmatmul.mubr.f32.gmra.mxu0 %v133
    %v243 = vpop.f32.mrf.mxu0
    %v244 = vadd.f32 %v71, %v243
    %v245 = vpop.f32.mrf.mxu0
    %246 = vmatprep.mubr.f32.mxu0 0.0
    %247 = vmatmul.mubr.f32.gmra.mxu0 %v136
    %v248 = vpop.f32.mrf.mxu0
    %v249 = vadd.f32 %v76, %v248
    %v250 = vpop.f32.mrf.mxu0
    %251 = vmatprep.mubr.f32.mxu0 0.0
    %252 = vmatmul.mubr.f32.gmra.mxu0 %v139
    %v253 = vpop.f32.mrf.mxu0
    %v254 = vadd.f32 %v81, %v253
    %v255 = vpop.f32.mrf.mxu0
    %256 = vmatprep.mubr.f32.mxu0 0.0
    %257 = vmatmul.mubr.f32.gmra.mxu0 %v142
    %v258 = vpop.f32.mrf.mxu0
    %v259 = vadd.f32 %v86, %v258
    %v260 = vpop.f32.mrf.mxu0
    %261 = vmatprep.mubr.f32.mxu0 0.0
    %262 = vmatmul.mubr.f32.gmra.mxu0 %v145
    %v263 = vpop.f32.mrf.mxu0
    %v264 = vadd.f32 %v91, %v263
    %v265 = vpop.f32.mrf.mxu0
    %266 = vmatprep.mubr.f32.mxu0 0.0
    %267 = vmatmul.mubr.f32.gmra.mxu0 %v148
    %v268 = vpop.f32.mrf.mxu0
    %v269 = vadd.f32 %v96, %v268
    %v270 = vpop.f32.mrf.mxu0
    %271 = vmatprep.mubr.f32.mxu0 0.0
    %272 = vmatmul.mubr.f32.gmra.mxu0 %v151
    %v273 = vpop.f32.mrf.mxu0
    %v274 = vadd.f32 %v101, %v273
    %v275 = vpop.f32.mrf.mxu0
    %276 = vmatprep.mubr.f32.mxu0 0.0
    %277 = vmatmul.mubr.f32.gmra.mxu0 %v154
    %v278 = vpop.f32.mrf.mxu0
    %v279 = vadd.f32 %v106, %v278
    %v280 = vpop.f32.mrf.mxu0
    %281 = vmatprep.mubr.f32.mxu0 0.0
    %282 = vmatmul.mubr.f32.gmra.mxu0 %v157
    %v283 = vpop.f32.mrf.mxu0
    %v284 = vadd.f32 %v111, %v283
    %v285 = vpop.f32.mrf.mxu0
    %286 = vmatprep.mubr.f32.mxu0 0.0
    %287 = vmatmul.mubr.f32.gmra.mxu0 %v160
    %v288 = vpop.f32.mrf.mxu0
    %v289 = vadd.f32 %v116, %v288
    %v290 = vpop.f32.mrf.mxu0
    %291 = vmatprep.mubr.f32.mxu0 0.0
    %292 = vmatmul.mubr.f32.gmra.mxu0 %v163
    %v293 = vpop.f32.mrf.mxu0
    %v294 = vadd.f32 %v121, %v293
    %v295 = vpop.f32.mrf.mxu0
    %296 = vmatprep.mubr.f32.mxu0 0.0
    %297 = vmatmul.mubr.f32.gmra.mxu0 %v166
    %v298 = vpop.f32.mrf.mxu0
    %v299 = vadd.f32 %v126, %v298
    %v300 = vpop.f32.mrf.mxu0
    %301 = vdwg.mxu0
    %v302 = vmul.f32 %v239, 0.5
    %v303 = vmul.f32 %v244, 0.5
    %v304 = vmul.f32 %v249, 0.5
    %v305 = vmul.f32 %v254, 0.5
    %v306 = vmul.f32 %v259, 0.5
    %v307 = vmul.f32 %v264, 0.5
    %v308 = vmul.f32 %v269, 0.5
    %v309 = vmul.f32 %v274, 0.5
    %v310 = vmul.f32 %v279, 0.5
    %v311 = vmul.f32 %v284, 0.5
    %v312 = vmul.f32 %v289, 0.5
    %v313 = vmul.f32 %v294, 0.5
    %v314 = vmul.f32 %v299, 0.5
    %v315 = vtanh.pop %v302
    %v316 = vtanh.pop %v303
    %v317 = vtanh.pop %v304
    %v318 = vtanh.pop %v305
    %v319 = vtanh.pop %v306
    %v320 = vtanh.pop %v307
    %v321 = vtanh.pop %v308
    %v322 = vtanh.pop %v309
    %v323 = vtanh.pop %v310
    %v324 = vtanh.pop %v311
    %v325 = vtanh.pop %v312
    %v326 = vtanh.pop %v313
    %v327 = vtanh.pop %v314
    %v328 = vadd.f32 %v315, 1.0
    %v329 = vadd.f32 %v316, 1.0
    %v330 = vadd.f32 %v317, 1.0
    %v331 = vadd.f32 %v318, 1.0
    %v332 = vadd.f32 %v319, 1.0
    %v333 = vadd.f32 %v320, 1.0
    %v334 = vadd.f32 %v321, 1.0
    %v335 = vadd.f32 %v322, 1.0
    %v336 = vadd.f32 %v323, 1.0
    %v337 = vadd.f32 %v324, 1.0
    %v338 = vadd.f32 %v325, 1.0
    %v339 = vadd.f32 %v326, 1.0
    %v340 = vadd.f32 %v327, 1.0
    %v341 = vmul.f32 %v328, 0.5
    %v342 = vmul.f32 %v329, 0.5
    %v343 = vmul.f32 %v330, 0.5
    %v344 = vmul.f32 %v331, 0.5
    %v345 = vmul.f32 %v332, 0.5
    %v346 = vmul.f32 %v333, 0.5
    %v347 = vmul.f32 %v334, 0.5
    %v348 = vmul.f32 %v335, 0.5
    %v349 = vmul.f32 %v336, 0.5
    %v350 = vmul.f32 %v337, 0.5
    %v351 = vmul.f32 %v338, 0.5
    %v352 = vmul.f32 %v339, 0.5
    %v353 = vmul.f32 %v340, 0.5
    %v354 = vld [vmem:[%s3] sm:$0xff]
    %v355 = vld [vmem:[%s3 + $0x8] sm:$0xff]
    %v356 = vld [vmem:[%s3 + $0x10] sm:$0xff]
    %v357 = vld [vmem:[%s3 + $0x18] sm:$0xff]
    %v358 = vld [vmem:[%s3 + $0x20] sm:$0xff]
    %v359 = vld [vmem:[%s3 + $0x28] sm:$0xff]
    %v360 = vld [vmem:[%s3 + $0x30] sm:$0xff]
    %v361 = vld [vmem:[%s3 + $0x38] sm:$0xff]
    %v362 = vld [vmem:[%s3 + $0x40] sm:$0xff]
    %v363 = vld [vmem:[%s3 + $0x48] sm:$0xff]
    %v364 = vld [vmem:[%s3 + $0x50] sm:$0xff]
    %v365 = vld [vmem:[%s3 + $0x58] sm:$0xff]
    %v366 = vld [vmem:[%s3 + $0x60] sm:$0xf]
    %v367 = vld [vmem:[%s4] sm:$0xff]
    %v368 = vld [vmem:[%s4 + $0x8] sm:$0xff]
    %v369 = vld [vmem:[%s4 + $0x10] sm:$0xff]
    %v370 = vld [vmem:[%s4 + $0x18] sm:$0xff]
    %v371 = vld [vmem:[%s4 + $0x20] sm:$0xff]
    %v372 = vld [vmem:[%s4 + $0x28] sm:$0xff]
    %v373 = vld [vmem:[%s4 + $0x30] sm:$0xff]
    %v374 = vld [vmem:[%s4 + $0x38] sm:$0xff]
    %v375 = vld [vmem:[%s4 + $0x40] sm:$0xff]
    %v376 = vld [vmem:[%s4 + $0x48] sm:$0xff]
    %v377 = vld [vmem:[%s4 + $0x50] sm:$0xff]
    %v378 = vld [vmem:[%s4 + $0x58] sm:$0xff]
    %v379 = vld [vmem:[%s4 + $0x60] sm:$0xf]
    %381 = vset.pattern.permute.xlu0 0
    %382 = vperm.xlu0 %381, %v367
    %v383 = vpop.permute.xlu0 %382
    %386 = vset.pattern.permute.xlu0 0
    %387 = vperm.xlu0 %386, %v368
    %v388 = vpop.permute.xlu0 %387
    %391 = vset.pattern.permute.xlu0 0
    %392 = vperm.xlu0 %391, %v369
    %v393 = vpop.permute.xlu0 %392
    %396 = vset.pattern.permute.xlu0 0
    %397 = vperm.xlu0 %396, %v370
    %v398 = vpop.permute.xlu0 %397
    %401 = vset.pattern.permute.xlu0 0
    %402 = vperm.xlu0 %401, %v371
    %v403 = vpop.permute.xlu0 %402
    %406 = vset.pattern.permute.xlu0 0
    %407 = vperm.xlu0 %406, %v372
    %v408 = vpop.permute.xlu0 %407
    %411 = vset.pattern.permute.xlu0 0
    %412 = vperm.xlu0 %411, %v373
    %v413 = vpop.permute.xlu0 %412
    %416 = vset.pattern.permute.xlu0 0
    %417 = vperm.xlu0 %416, %v374
    %v418 = vpop.permute.xlu0 %417
    %421 = vset.pattern.permute.xlu0 0
    %422 = vperm.xlu0 %421, %v375
    %v423 = vpop.permute.xlu0 %422
    %426 = vset.pattern.permute.xlu0 0
    %427 = vperm.xlu0 %426, %v376
    %v428 = vpop.permute.xlu0 %427
    %431 = vset.pattern.permute.xlu0 0
    %432 = vperm.xlu0 %431, %v377
    %v433 = vpop.permute.xlu0 %432
    %436 = vset.pattern.permute.xlu0 0
    %437 = vperm.xlu0 %436, %v378
    %v438 = vpop.permute.xlu0 %437
    %441 = vset.pattern.permute.xlu0 0
    %442 = vperm.xlu0 %441, %v379
    %v443 = vpop.permute.xlu0 %442
    %vm445 = vcmask 818176
    %v447 = vsel %vm445, %v354, 0
    %v450 = vsel %vm445, %v355, 0
    %v453 = vsel %vm445, %v356, 0
    %v456 = vsel %vm445, %v357, 0
    %v459 = vsel %vm445, %v358, 0
    %v462 = vsel %vm445, %v359, 0
    %v465 = vsel %vm445, %v360, 0
    %v468 = vsel %vm445, %v361, 0
    %v471 = vsel %vm445, %v362, 0
    %v474 = vsel %vm445, %v363, 0
    %v477 = vsel %vm445, %v364, 0
    %v480 = vsel %vm445, %v365, 0
    %v483 = vsel %vm445, %v366, 0
    %vm485 = vcmask 1043456
    %v487 = vsel %vm485, %v353, 0
    %489 = vmatprep.subr.mxu0 0.0
    %490 = vmatpush1.msra.mxu0 0.0
    %491 = vmatprep.subr.mxu0 0.0
    %492 = vmatpush1.msra.mxu0 0.0
    %493 = vmatprep.subr.mxu0 0.0
    %494 = vmatpush1.msra.mxu0 0.0
    %495 = vmatprep.subr.mxu0 0.0
    %496 = vmatpush1.msra.mxu0 %v487
    %497 = vmatprep.subr.mxu0 0.0
    %498 = vmatpush1.msra.mxu0 %v352
    %499 = vmatprep.subr.mxu0 0.0
    %500 = vmatpush1.msra.mxu0 %v351
    %501 = vmatprep.subr.mxu0 0.0
    %502 = vmatpush1.msra.mxu0 %v350
    %503 = vmatprep.subr.mxu0 0.0
    %504 = vmatpush1.msra.mxu0 %v349
    %505 = vmatprep.subr.mxu0 0.0
    %506 = vmatpush1.msra.mxu0 %v348
    %507 = vmatprep.subr.mxu0 0.0
    %508 = vmatpush1.msra.mxu0 %v347
    %509 = vmatprep.subr.mxu0 0.0
    %510 = vmatpush1.msra.mxu0 %v346
    %511 = vmatprep.subr.mxu0 0.0
    %512 = vmatpush1.msra.mxu0 %v345
    %513 = vmatprep.subr.mxu0 0.0
    %514 = vmatpush1.msra.mxu0 %v344
    %515 = vmatprep.subr.mxu0 0.0
    %516 = vmatpush1.msra.mxu0 %v343
    %517 = vmatprep.subr.mxu0 0.0
    %518 = vmatpush1.msra.mxu0 %v342
    %519 = vmatprep.subr.mxu0 0.0
    %520 = vmatpush1.msra.mxu0 %v341
    %521 = vmatprep.subr.mxu0 0.0
    %522 = vmatpush2.msra.mxu0 0.0
    %523 = vmatprep.subr.mxu0 0.0
    %524 = vmatpush2.msra.mxu0 0.0
    %525 = vmatprep.subr.mxu0 0.0
    %526 = vmatpush2.msra.mxu0 0.0
    %527 = vmatprep.subr.mxu0 0.0
    %528 = vmatpush2.msra.mxu0 0.0
    %529 = vmatprep.subr.mxu0 0.0
    %530 = vmatpush2.msra.mxu0 0.0
    %531 = vmatprep.subr.mxu0 0.0
    %532 = vmatpush2.msra.mxu0 0.0
    %533 = vmatprep.subr.mxu0 0.0
    %534 = vmatpush2.msra.mxu0 0.0
    %535 = vmatprep.subr.mxu0 0.0
    %536 = vmatpush2.msra.mxu0 0.0
    %537 = vmatprep.subr.mxu0 0.0
    %538 = vmatpush2.msra.mxu0 0.0
    %539 = vmatprep.subr.mxu0 0.0
    %540 = vmatpush2.msra.mxu0 0.0
    %541 = vmatprep.subr.mxu0 0.0
    %542 = vmatpush2.msra.mxu0 0.0
    %543 = vmatprep.subr.mxu0 0.0
    %544 = vmatpush2.msra.mxu0 0.0
    %545 = vmatprep.subr.mxu0 0.0
    %546 = vmatpush2.msra.mxu0 0.0
    %547 = vmatprep.subr.mxu0 0.0
    %548 = vmatpush2.msra.mxu0 0.0
    %549 = vmatprep.subr.mxu0 0.0
    %550 = vmatpush2.msra.mxu0 0.0
    %551 = vmatprep.subr.mxu0 0.0
    %552 = vmatpush2.msra.mxu0 0.0
    %553 = vmatprep.mubr.f32.mxu0 0.0
    %554 = vmatmul.mubr.f32.gmra.mxu0 %v447
    %v555 = vpop.f32.mrf.mxu0
    %v556 = vadd.f32 %v383, %v555
    %v557 = vpop.f32.mrf.mxu0
    %558 = vmatprep.mubr.f32.mxu0 0.0
    %559 = vmatmul.mubr.f32.gmra.mxu0 %v450
    %v560 = vpop.f32.mrf.mxu0
    %v561 = vadd.f32 %v388, %v560
    %v562 = vpop.f32.mrf.mxu0
    %563 = vmatprep.mubr.f32.mxu0 0.0
    %564 = vmatmul.mubr.f32.gmra.mxu0 %v453
    %v565 = vpop.f32.mrf.mxu0
    %v566 = vadd.f32 %v393, %v565
    %v567 = vpop.f32.mrf.mxu0
    %568 = vmatprep.mubr.f32.mxu0 0.0
    %569 = vmatmul.mubr.f32.gmra.mxu0 %v456
    %v570 = vpop.f32.mrf.mxu0
    %v571 = vadd.f32 %v398, %v570
    %v572 = vpop.f32.mrf.mxu0
    %573 = vmatprep.mubr.f32.mxu0 0.0
    %574 = vmatmul.mubr.f32.gmra.mxu0 %v459
    %v575 = vpop.f32.mrf.mxu0
    %v576 = vadd.f32 %v403, %v575
    %v577 = vpop.f32.mrf.mxu0
    %578 = vmatprep.mubr.f32.mxu0 0.0
    %579 = vmatmul.mubr.f32.gmra.mxu0 %v462
    %v580 = vpop.f32.mrf.mxu0
    %v581 = vadd.f32 %v408, %v580
    %v582 = vpop.f32.mrf.mxu0
    %583 = vmatprep.mubr.f32.mxu0 0.0
    %584 = vmatmul.mubr.f32.gmra.mxu0 %v465
    %v585 = vpop.f32.mrf.mxu0
    %v586 = vadd.f32 %v413, %v585
    %v587 = vpop.f32.mrf.mxu0
    %588 = vmatprep.mubr.f32.mxu0 0.0
    %589 = vmatmul.mubr.f32.gmra.mxu0 %v468
    %v590 = vpop.f32.mrf.mxu0
    %v591 = vadd.f32 %v418, %v590
    %v592 = vpop.f32.mrf.mxu0
    %593 = vmatprep.mubr.f32.mxu0 0.0
    %594 = vmatmul.mubr.f32.gmra.mxu0 %v471
    %v595 = vpop.f32.mrf.mxu0
    %v596 = vadd.f32 %v423, %v595
    %v597 = vpop.f32.mrf.mxu0
    %598 = vmatprep.mubr.f32.mxu0 0.0
    %599 = vmatmul.mubr.f32.gmra.mxu0 %v474
    %v600 = vpop.f32.mrf.mxu0
    %v601 = vadd.f32 %v428, %v600
    %v602 = vpop.f32.mrf.mxu0
    %603 = vmatprep.mubr.f32.mxu0 0.0
    %604 = vmatmul.mubr.f32.gmra.mxu0 %v477
    %v605 = vpop.f32.mrf.mxu0
    %v606 = vadd.f32 %v433, %v605
    %v607 = vpop.f32.mrf.mxu0
    %608 = vmatprep.mubr.f32.mxu0 0.0
    %609 = vmatmul.mubr.f32.gmra.mxu0 %v480
    %v610 = vpop.f32.mrf.mxu0
    %v611 = vadd.f32 %v438, %v610
    %v612 = vpop.f32.mrf.mxu0
    %613 = vmatprep.mubr.f32.mxu0 0.0
    %614 = vmatmul.mubr.f32.gmra.mxu0 %v483
    %v615 = vpop.f32.mrf.mxu0
    %v616 = vadd.f32 %v443, %v615
    %v617 = vpop.f32.mrf.mxu0
    %618 = vdwg.mxu0
    %v619 = vmul.f32 %v556, 0.5
    %v620 = vmul.f32 %v561, 0.5
    %v621 = vmul.f32 %v566, 0.5
    %v622 = vmul.f32 %v571, 0.5
    %v623 = vmul.f32 %v576, 0.5
    %v624 = vmul.f32 %v581, 0.5
    %v625 = vmul.f32 %v586, 0.5
    %v626 = vmul.f32 %v591, 0.5
    %v627 = vmul.f32 %v596, 0.5
    %v628 = vmul.f32 %v601, 0.5
    %v629 = vmul.f32 %v606, 0.5
    %v630 = vmul.f32 %v611, 0.5
    %v631 = vmul.f32 %v616, 0.5
    %v632 = vtanh.pop %v619
    %v633 = vtanh.pop %v620
    %v634 = vtanh.pop %v621
    %v635 = vtanh.pop %v622
    %v636 = vtanh.pop %v623
    %v637 = vtanh.pop %v624
    %v638 = vtanh.pop %v625
    %v639 = vtanh.pop %v626
    %v640 = vtanh.pop %v627
    %v641 = vtanh.pop %v628
    %v642 = vtanh.pop %v629
    %v643 = vtanh.pop %v630
    %v644 = vtanh.pop %v631
    %v645 = vadd.f32 %v632, 1.0
    %v646 = vadd.f32 %v633, 1.0
    %v647 = vadd.f32 %v634, 1.0
    %v648 = vadd.f32 %v635, 1.0
    %v649 = vadd.f32 %v636, 1.0
    %v650 = vadd.f32 %v637, 1.0
    %v651 = vadd.f32 %v638, 1.0
    %v652 = vadd.f32 %v639, 1.0
    %v653 = vadd.f32 %v640, 1.0
    %v654 = vadd.f32 %v641, 1.0
    %v655 = vadd.f32 %v642, 1.0
    %v656 = vadd.f32 %v643, 1.0
    %v657 = vadd.f32 %v644, 1.0
    %v658 = vmul.f32 %v645, 0.5
    %v659 = vmul.f32 %v646, 0.5
    %v660 = vmul.f32 %v647, 0.5
    %v661 = vmul.f32 %v648, 0.5
    %v662 = vmul.f32 %v649, 0.5
    %v663 = vmul.f32 %v650, 0.5
    %v664 = vmul.f32 %v651, 0.5
    %v665 = vmul.f32 %v652, 0.5
    %v666 = vmul.f32 %v653, 0.5
    %v667 = vmul.f32 %v654, 0.5
    %v668 = vmul.f32 %v655, 0.5
    %v669 = vmul.f32 %v656, 0.5
    %v670 = vmul.f32 %v657, 0.5
    %v671 = vld [vmem:[%s5] sm:$0xff]
    %v672 = vld [vmem:[%s5 + $0x8] sm:$0xff]
    %v673 = vld [vmem:[%s5 + $0x10] sm:$0xff]
    %v674 = vld [vmem:[%s5 + $0x18] sm:$0xff]
    %v675 = vld [vmem:[%s5 + $0x20] sm:$0xff]
    %v676 = vld [vmem:[%s5 + $0x28] sm:$0xff]
    %v677 = vld [vmem:[%s5 + $0x30] sm:$0x3]
    %v678 = vld [vmem:[%s6] sm:$0xff]
    %v679 = vld [vmem:[%s6 + $0x8] sm:$0xff]
    %v680 = vld [vmem:[%s6 + $0x10] sm:$0xff]
    %v681 = vld [vmem:[%s6 + $0x18] sm:$0xff]
    %v682 = vld [vmem:[%s6 + $0x20] sm:$0xff]
    %v683 = vld [vmem:[%s6 + $0x28] sm:$0xff]
    %v684 = vld [vmem:[%s6 + $0x30] sm:$0x3]
    %686 = vset.pattern.permute.xlu0 0
    %687 = vperm.xlu0 %686, %v678
    %v688 = vpop.permute.xlu0 %687
    %691 = vset.pattern.permute.xlu0 0
    %692 = vperm.xlu0 %691, %v679
    %v693 = vpop.permute.xlu0 %692
    %696 = vset.pattern.permute.xlu0 0
    %697 = vperm.xlu0 %696, %v680
    %v698 = vpop.permute.xlu0 %697
    %701 = vset.pattern.permute.xlu0 0
    %702 = vperm.xlu0 %701, %v681
    %v703 = vpop.permute.xlu0 %702
    %706 = vset.pattern.permute.xlu0 0
    %707 = vperm.xlu0 %706, %v682
    %v708 = vpop.permute.xlu0 %707
    %711 = vset.pattern.permute.xlu0 0
    %712 = vperm.xlu0 %711, %v683
    %v713 = vpop.permute.xlu0 %712
    %716 = vset.pattern.permute.xlu0 0
    %717 = vperm.xlu0 %716, %v684
    %v718 = vpop.permute.xlu0 %717
    %v721 = vsel %vm445, %v671, 0
    %v724 = vsel %vm445, %v672, 0
    %v727 = vsel %vm445, %v673, 0
    %v730 = vsel %vm445, %v674, 0
    %v733 = vsel %vm445, %v675, 0
    %v736 = vsel %vm445, %v676, 0
    %v739 = vsel %vm445, %v677, 0
    %v742 = vsel %vm485, %v670, 0
    %744 = vmatprep.subr.mxu0 0.0
    %745 = vmatpush1.msra.mxu0 0.0
    %746 = vmatprep.subr.mxu0 0.0
    %747 = vmatpush1.msra.mxu0 0.0
    %748 = vmatprep.subr.mxu0 0.0
    %749 = vmatpush1.msra.mxu0 0.0
    %750 = vmatprep.subr.mxu0 0.0
    %751 = vmatpush1.msra.mxu0 %v742
    %752 = vmatprep.subr.mxu0 0.0
    %753 = vmatpush1.msra.mxu0 %v669
    %754 = vmatprep.subr.mxu0 0.0
    %755 = vmatpush1.msra.mxu0 %v668
    %756 = vmatprep.subr.mxu0 0.0
    %757 = vmatpush1.msra.mxu0 %v667
    %758 = vmatprep.subr.mxu0 0.0
    %759 = vmatpush1.msra.mxu0 %v666
    %760 = vmatprep.subr.mxu0 0.0
    %761 = vmatpush1.msra.mxu0 %v665
    %762 = vmatprep.subr.mxu0 0.0
    %763 = vmatpush1.msra.mxu0 %v664
    %764 = vmatprep.subr.mxu0 0.0
    %765 = vmatpush1.msra.mxu0 %v663
    %766 = vmatprep.subr.mxu0 0.0
    %767 = vmatpush1.msra.mxu0 %v662
    %768 = vmatprep.subr.mxu0 0.0
    %769 = vmatpush1.msra.mxu0 %v661
    %770 = vmatprep.subr.mxu0 0.0
    %771 = vmatpush1.msra.mxu0 %v660
    %772 = vmatprep.subr.mxu0 0.0
    %773 = vmatpush1.msra.mxu0 %v659
    %774 = vmatprep.subr.mxu0 0.0
    %775 = vmatpush1.msra.mxu0 %v658
    %776 = vmatprep.subr.mxu0 0.0
    %777 = vmatpush2.msra.mxu0 0.0
    %778 = vmatprep.subr.mxu0 0.0
    %779 = vmatpush2.msra.mxu0 0.0
    %780 = vmatprep.subr.mxu0 0.0
    %781 = vmatpush2.msra.mxu0 0.0
    %782 = vmatprep.subr.mxu0 0.0
    %783 = vmatpush2.msra.mxu0 0.0
    %784 = vmatprep.subr.mxu0 0.0
    %785 = vmatpush2.msra.mxu0 0.0
    %786 = vmatprep.subr.mxu0 0.0
    %787 = vmatpush2.msra.mxu0 0.0
    %788 = vmatprep.subr.mxu0 0.0
    %789 = vmatpush2.msra.mxu0 0.0
    %790 = vmatprep.subr.mxu0 0.0
    %791 = vmatpush2.msra.mxu0 0.0
    %792 = vmatprep.subr.mxu0 0.0
    %793 = vmatpush2.msra.mxu0 0.0
    %794 = vmatprep.subr.mxu0 0.0
    %795 = vmatpush2.msra.mxu0 0.0
    %796 = vmatprep.subr.mxu0 0.0
    %797 = vmatpush2.msra.mxu0 0.0
    %798 = vmatprep.subr.mxu0 0.0
    %799 = vmatpush2.msra.mxu0 0.0
    %800 = vmatprep.subr.mxu0 0.0
    %801 = vmatpush2.msra.mxu0 0.0
    %802 = vmatprep.subr.mxu0 0.0
    %803 = vmatpush2.msra.mxu0 0.0
    %804 = vmatprep.subr.mxu0 0.0
    %805 = vmatpush2.msra.mxu0 0.0
    %806 = vmatprep.subr.mxu0 0.0
    %807 = vmatpush2.msra.mxu0 0.0
    %808 = vmatprep.mubr.f32.mxu0 0.0
    %809 = vmatmul.mubr.f32.gmra.mxu0 %v721
    %v810 = vpop.f32.mrf.mxu0
    %v811 = vadd.f32 %v688, %v810
    %v812 = vpop.f32.mrf.mxu0
    %813 = vmatprep.mubr.f32.mxu0 0.0
    %814 = vmatmul.mubr.f32.gmra.mxu0 %v724
    %v815 = vpop.f32.mrf.mxu0
    %v816 = vadd.f32 %v693, %v815
    %v817 = vpop.f32.mrf.mxu0
    %818 = vmatprep.mubr.f32.mxu0 0.0
    %819 = vmatmul.mubr.f32.gmra.mxu0 %v727
    %v820 = vpop.f32.mrf.mxu0
    %v821 = vadd.f32 %v698, %v820
    %v822 = vpop.f32.mrf.mxu0
    %823 = vmatprep.mubr.f32.mxu0 0.0
    %824 = vmatmul.mubr.f32.gmra.mxu0 %v730
    %v825 = vpop.f32.mrf.mxu0
    %v826 = vadd.f32 %v703, %v825
    %v827 = vpop.f32.mrf.mxu0
    %828 = vmatprep.mubr.f32.mxu0 0.0
    %829 = vmatmul.mubr.f32.gmra.mxu0 %v733
    %v830 = vpop.f32.mrf.mxu0
    %v831 = vadd.f32 %v708, %v830
    %v832 = vpop.f32.mrf.mxu0
    %833 = vmatprep.mubr.f32.mxu0 0.0
    %834 = vmatmul.mubr.f32.gmra.mxu0 %v736
    %v835 = vpop.f32.mrf.mxu0
    %v836 = vadd.f32 %v713, %v835
    %v837 = vpop.f32.mrf.mxu0
    %838 = vmatprep.mubr.f32.mxu0 0.0
    %839 = vmatmul.mubr.f32.gmra.mxu0 %v739
    %v840 = vpop.f32.mrf.mxu0
    %v841 = vadd.f32 %v718, %v840
    %v842 = vpop.f32.mrf.mxu0
    %843 = vdwg.mxu0
    %v844 = vmul.f32 %v811, 0.5
    %v845 = vmul.f32 %v816, 0.5
    %v846 = vmul.f32 %v821, 0.5
    %v847 = vmul.f32 %v826, 0.5
    %v848 = vmul.f32 %v831, 0.5
    %v849 = vmul.f32 %v836, 0.5
    %v850 = vmul.f32 %v841, 0.5
    %v851 = vtanh.pop %v844
    %v852 = vtanh.pop %v845
    %v853 = vtanh.pop %v846
    %v854 = vtanh.pop %v847
    %v855 = vtanh.pop %v848
    %v856 = vtanh.pop %v849
    %v857 = vtanh.pop %v850
    %v858 = vadd.f32 %v851, 1.0
    %v859 = vadd.f32 %v852, 1.0
    %v860 = vadd.f32 %v853, 1.0
    %v861 = vadd.f32 %v854, 1.0
    %v862 = vadd.f32 %v855, 1.0
    %v863 = vadd.f32 %v856, 1.0
    %v864 = vadd.f32 %v857, 1.0
    %v865 = vmul.f32 %v858, 0.5
    %v866 = vmul.f32 %v859, 0.5
    %v867 = vmul.f32 %v860, 0.5
    %v868 = vmul.f32 %v861, 0.5
    %v869 = vmul.f32 %v862, 0.5
    %v870 = vmul.f32 %v863, 0.5
    %v871 = vmul.f32 %v864, 0.5
    %v872 = vld [vmem:[%s7] sm:$0x1]
    %v873 = vld [vmem:[#allocation2] sm:$0x1]
    %875 = vset.pattern.permute.xlu0 0
    %876 = vperm.xlu0 %875, %v873
    %v877 = vpop.permute.xlu0 %876
    %v879 = vlaneseq
    %v880 = vshrl.u32 %v879, 7
    %v881 = vsub.s32 0, %v880
    %v882 = vrot.slane %v877, %v881
    %vm883 = vcmask 408576
    %v885 = vsel %vm883, %v872, 0
    %vm887 = vcmask 1041408
    %v889 = vsel %vm887, %v871, 0
    %891 = vmatprep.subr.mxu0 0.0
    %892 = vmatpush1.msra.mxu0 0.0
    %893 = vmatprep.subr.mxu0 0.0
    %894 = vmatpush1.msra.mxu0 0.0
    %895 = vmatprep.subr.mxu0 0.0
    %896 = vmatpush1.msra.mxu0 0.0
    %897 = vmatprep.subr.mxu0 0.0
    %898 = vmatpush1.msra.mxu0 0.0
    %899 = vmatprep.subr.mxu0 0.0
    %900 = vmatpush1.msra.mxu0 0.0
    %901 = vmatprep.subr.mxu0 0.0
    %902 = vmatpush1.msra.mxu0 0.0
    %903 = vmatprep.subr.mxu0 0.0
    %904 = vmatpush1.msra.mxu0 0.0
    %905 = vmatprep.subr.mxu0 0.0
    %906 = vmatpush1.msra.mxu0 0.0
    %907 = vmatprep.subr.mxu0 0.0
    %908 = vmatpush1.msra.mxu0 0.0
    %909 = vmatprep.subr.mxu0 0.0
    %910 = vmatpush1.msra.mxu0 %v889
    %911 = vmatprep.subr.mxu0 0.0
    %912 = vmatpush1.msra.mxu0 %v870
    %913 = vmatprep.subr.mxu0 0.0
    %914 = vmatpush1.msra.mxu0 %v869
    %915 = vmatprep.subr.mxu0 0.0
    %916 = vmatpush1.msra.mxu0 %v868
    %917 = vmatprep.subr.mxu0 0.0
    %918 = vmatpush1.msra.mxu0 %v867
    %919 = vmatprep.subr.mxu0 0.0
    %920 = vmatpush1.msra.mxu0 %v866
    %921 = vmatprep.subr.mxu0 0.0
    %922 = vmatpush1.msra.mxu0 %v865
    %923 = vmatprep.subr.mxu0 0.0
    %924 = vmatpush2.msra.mxu0 0.0
    %925 = vmatprep.subr.mxu0 0.0
    %926 = vmatpush2.msra.mxu0 0.0
    %927 = vmatprep.subr.mxu0 0.0
    %928 = vmatpush2.msra.mxu0 0.0
    %929 = vmatprep.subr.mxu0 0.0
    %930 = vmatpush2.msra.mxu0 0.0
    %931 = vmatprep.subr.mxu0 0.0
    %932 = vmatpush2.msra.mxu0 0.0
    %933 = vmatprep.subr.mxu0 0.0
    %934 = vmatpush2.msra.mxu0 0.0
    %935 = vmatprep.subr.mxu0 0.0
    %936 = vmatpush2.msra.mxu0 0.0
    %937 = vmatprep.subr.mxu0 0.0
    %938 = vmatpush2.msra.mxu0 0.0
    %939 = vmatprep.subr.mxu0 0.0
    %940 = vmatpush2.msra.mxu0 0.0
    %941 = vmatprep.subr.mxu0 0.0
    %942 = vmatpush2.msra.mxu0 0.0
    %943 = vmatprep.subr.mxu0 0.0
    %944 = vmatpush2.msra.mxu0 0.0
    %945 = vmatprep.subr.mxu0 0.0
    %946 = vmatpush2.msra.mxu0 0.0
    %947 = vmatprep.subr.mxu0 0.0
    %948 = vmatpush2.msra.mxu0 0.0
    %949 = vmatprep.subr.mxu0 0.0
    %950 = vmatpush2.msra.mxu0 0.0
    %951 = vmatprep.subr.mxu0 0.0
    %952 = vmatpush2.msra.mxu0 0.0
    %953 = vmatprep.subr.mxu0 0.0
    %954 = vmatpush2.msra.mxu0 0.0
    %955 = vmatprep.mubr.f32.mxu0 0.0
    %956 = vmatmul.mubr.f32.gmra.mxu0 %v885
    %v957 = vpop.f32.mrf.mxu0
    %v958 = vadd.f32 %v882, %v957
    %v959 = vpop.f32.mrf.mxu0
    %960 = vdwg.mxu0
    %961 = vst [vmem:[#allocation3] sm:$0x1] %v958
    // Predicated region
    $region38: #{tpu_custom_call.1} parent=1 // pred_check
      _
    $region39: #{tpu_custom_call.1} parent=1 // pred_check_branch
      %963 = sbr.rel (0) target = $region41
    $region40: #{tpu_custom_call.1} parent=1 // pred_region
      %s965 = ssub.s32 16, 16
      %966 = vsyncadd [#allocation4], %s965
      %s968 = sshll.u32 [#allocation3], 4
      %s969 = int_to_ptr.vmem [resolvable:$true] %s968
      %971 = dma.vmem_to_hbm [thread:$0]  %s969, 16, %s9, [#allocation4]
    $region41: #{tpu_custom_call.1} parent=1 // pred_fallthru
      _
    // Predicated region
    $region42: #{tpu_custom_call.1} parent=1 // pred_check
      _
    $region43: #{tpu_custom_call.1} parent=1 // pred_check_branch
      %973 = sbr.rel (0) target = $region45
    $region44: #{tpu_custom_call.1} parent=1 // pred_region
      %974 = dma.done [#allocation4], 16
    $region45: #{tpu_custom_call.1} parent=1 // pred_fallthru
      _
    %975 = vsyncpa [#allocation4], 1

</llo_original>
